<compile_context>
chip_gen: v5e
topology: v5e:2x2
jax: 0.10.0
libtpu: 0.0.40
codegen_flags: <defaults>
</compile_context>

<pallas_src>
import jax
import jax.numpy as jnp
from jax.experimental import pallas as pl
from jax.experimental.pallas import tpu as pltpu


def _make_kernel(layer_dims, row_offsets, inner_timesteps, precision):
    """Kernel for a fixed (static) layer structure.

    layer_dims:   tuple of (in_f, out_f) per Linear (core layers + final out)
    row_offsets:  row offset of each layer's [W; b] block inside the slab
    """
    n_layers = len(layer_dims)
    out_f_final = layer_dims[-1][1]

    def kernel(x_ref, p_ref, out_ref):
        h = x_ref[...]                                     # (block_b, F) f32
        for li in range(n_layers):
            in_f, out_f = layer_dims[li]
            r = row_offsets[li]
            # Static slices of the resident parameter slab are free views.
            w = p_ref[r:r + in_f, :out_f]                  # (in_f, out_f)
            b = p_ref[r + in_f:r + in_f + 1, :out_f]       # (1, out_f)
            y = jnp.dot(h, w, preferred_element_type=jnp.float32,
                        precision=precision) + b
            # ReLU (+ identity eval-mode dropout) on core layers only.
            h = jnp.maximum(y, 0.0) if li < n_layers - 1 else y

        # h: (block_b, 2).  Tile across T along the lane axis so the output
        # block is one dense (block_b, T*2) slab -> single HBM writeback DMA.
        for t in range(inner_timesteps):
            out_ref[:, t * out_f_final:(t + 1) * out_f_final] = h

    return kernel


def pack_regression_params(dense_params, out_w, out_b):
    """One-time parameter prep: pack all Linear weights/biases into a single
    128-lane-padded f32 slab (one DMA into the kernel instead of 2N+2).

    dense_params: list of (W (in_f, out_f), b (1, out_f) or (out_f,))
    out_w:        (num_fc, 2),  out_b: (1, 2) or (2,)
    Returns (slab (R, LANE) f32, layer_dims, row_offsets).
    """
    layers = list(dense_params) + [(out_w, out_b)]
    max_out = max(int(w.shape[1]) for w, _ in layers)
    lane = max(128, -(-max_out // 128) * 128)

    rows, layer_dims, row_offsets = [], [], []
    r = 0
    for w, b in layers:
        in_f, out_f = int(w.shape[0]), int(w.shape[1])
        w32 = jnp.asarray(w, jnp.float32)
        b32 = jnp.reshape(jnp.asarray(b, jnp.float32), (1, out_f))
        rows.append(jnp.zeros((in_f, lane), jnp.float32).at[:, :out_f].set(w32))
        rows.append(jnp.zeros((1, lane), jnp.float32).at[:, :out_f].set(b32))
        layer_dims.append((in_f, out_f))
        row_offsets.append(r)
        r += in_f + 1
    slab = jnp.concatenate(rows, axis=0)
    return slab, tuple(layer_dims), tuple(row_offsets)


def regression_block_forward(x, slab, layer_dims, row_offsets, inner_timesteps,
                             block_b=None, precision=None):
    """RegressionBlock.forward (eval mode).

    x: (B, F) f32;  slab/layer_dims/row_offsets from pack_regression_params.
    Returns (B, inner_timesteps, 2) f32.

    `precision=jax.lax.Precision.HIGHEST` gives bit-faithful f32 MXU matmuls
    if parity with PyTorch fp32 Linear is required (default precision here
    matches the plain-JAX reference used in the test).
    """
    B, F = x.shape
    T = int(inner_timesteps)
    assert layer_dims[0][0] == F, "x feature dim must match first Linear"
    out_f_final = layer_dims[-1][1]
    R, LANE = slab.shape

    # Batch tiling: single block at small B (launch-bound regime); at large B
    # tile so per-block VMEM stays bounded (v7x: 64 MiB physical) and the
    # "parallel" grid can pipeline / shard across TensorCores.
    if block_b is None:
        block_b = B if B <= 1024 else 512
    grid = (pl.cdiv(B, block_b),)

    flops = sum(2 * B * in_f * out_f for in_f, out_f in layer_dims)
    bytes_accessed = (x.size * x.dtype.itemsize
                      + slab.size * slab.dtype.itemsize
                      + B * T * out_f_final * 4)

    out_flat = pl.pallas_call(
        _make_kernel(layer_dims, row_offsets, T, precision),
        out_shape=jax.ShapeDtypeStruct((B, T * out_f_final), jnp.float32),
        grid=grid,
        in_specs=[
            # x: tiled over batch (VMEM-staged by the pipeline).
            pl.BlockSpec((block_b, F), lambda i: (i, 0)),
            # Parameter slab: whole array, pinned resident across grid steps.
            pl.BlockSpec((R, LANE), lambda i: (0, 0)),
        ],
        out_specs=pl.BlockSpec((block_b, T * out_f_final), lambda i: (i, 0)),
        compiler_params=pltpu.CompilerParams(
            dimension_semantics=("parallel",)),
        cost_estimate=pl.CostEstimate(
            flops=flops, transcendentals=0, bytes_accessed=bytes_accessed),
    )(x, slab)

    # Free (metadata-only) view: (B, T*2) -> (B, T, 2).
    return out_flat.reshape(B, T, out_f_final)


if __name__ == "__main__":
    # Small shapes consistent with the module:
    #   batch B=8, in_features=32, num_fc=32, num_dense=2, inner_timesteps=4
    B, F, H, T, NUM_DENSE = 8, 32, 32, 4, 2

    key = jax.random.PRNGKey(0)
    keys = jax.random.split(key, 2 * NUM_DENSE + 3)

    x = jax.random.normal(keys[0], (B, F), dtype=jnp.float32)

    dense_params = []
    in_f = F
    ki = 1
    for _ in range(NUM_DENSE):
        w = jax.random.normal(keys[ki], (in_f, H), dtype=jnp.float32) * 0.1
        b = jax.random.normal(keys[ki + 1], (1, H), dtype=jnp.float32) * 0.1
        dense_params.append((w, b))
        in_f = H
        ki += 2

    out_w = jax.random.normal(keys[ki], (H, 2), dtype=jnp.float32) * 0.1
    out_b = jax.random.normal(keys[ki + 1], (1, 2), dtype=jnp.float32) * 0.1

    # One-time parameter packing (amortized across forwards).
    slab, layer_dims, row_offsets = pack_regression_params(dense_params, out_w, out_b)

    y = regression_block_forward(x, slab, layer_dims, row_offsets, T)
    jax.block_until_ready(y)
    assert y.shape == (B, T, 2), y.shape

    # Pure-JAX reference (timesteps all see identical input -> identical out).
    h = x
    for (w, b) in dense_params:
        h = jnp.maximum(h @ w + b, 0.0)
    ref = jnp.broadcast_to((h @ out_w + out_b)[:, None, :], (B, T, 2))
    assert jnp.allclose(y, ref, atol=1e-5, rtol=1e-5), "kernel/reference mismatch"

    print("KERNEL_OK")
</pallas_src>

<mosaic_0001>
module attributes {stable_mosaic.version = 11 : i64} {
  func.func @kernel(%arg0: i32, %arg1: memref<8x32xf32, #tpu.memory_space<vmem>>, %arg2: memref<99x128xf32, #tpu.memory_space<vmem>>, %arg3: memref<8x8xf32, #tpu.memory_space<vmem>>) attributes {dimension_semantics = [#tpu.dimension_semantics<parallel>], iteration_bounds = array<i64: 1>, scalar_prefetch = 0 : i64, scratch_operands = 0 : i64, tpu.core_type = #tpu.core_type<tc>, window_params = [{transform_indices = @transform_0, window_bounds = array<i64: 8, 32>}, {pipeline_mode = #tpu.pipeline_mode<synchronous>, transform_indices = @transform_1, window_bounds = array<i64: 99, 128>}, {transform_indices = @transform_2, window_bounds = array<i64: 8, 8>}]} {
    %c0 = arith.constant 0 : index
    %c0_0 = arith.constant 0 : index
    %0 = vector.load %arg1[%c0, %c0_0] : memref<8x32xf32, #tpu.memory_space<vmem>>, vector<8x32xf32>
    %c0_1 = arith.constant 0 : index
    %c0_2 = arith.constant 0 : index
    %1 = vector.load %arg2[%c0_1, %c0_2] : memref<99x128xf32, #tpu.memory_space<vmem>>, vector<32x32xf32>
    %c32 = arith.constant 32 : index
    %c0_3 = arith.constant 0 : index
    %2 = vector.load %arg2[%c32, %c0_3] : memref<99x128xf32, #tpu.memory_space<vmem>>, vector<1x32xf32>
    %cst = arith.constant dense<0.000000e+00> : vector<8x32xf32>
    %3 = tpu.matmul %0, %1, %cst {dimension_numbers = #tpu.dot_dimension_numbers<[1], [0], [0], [1], [0, 0, 1, 1], [], []>} : vector<8x32xf32>, vector<32x32xf32>, vector<8x32xf32> -> vector<8x32xf32>
    %4 = vector.broadcast %2 : vector<1x32xf32> to vector<8x32xf32>
    %5 = arith.addf %3, %4 : vector<8x32xf32>
    %cst_4 = arith.constant 0.000000e+00 : f32
    %6 = vector.broadcast %cst_4 : f32 to vector<8x32xf32>
    %7 = arith.maximumf %5, %6 : vector<8x32xf32>
    %c33 = arith.constant 33 : index
    %c0_5 = arith.constant 0 : index
    %8 = vector.load %arg2[%c33, %c0_5] : memref<99x128xf32, #tpu.memory_space<vmem>>, vector<32x32xf32>
    %c65 = arith.constant 65 : index
    %c0_6 = arith.constant 0 : index
    %9 = vector.load %arg2[%c65, %c0_6] : memref<99x128xf32, #tpu.memory_space<vmem>>, vector<1x32xf32>
    %cst_7 = arith.constant dense<0.000000e+00> : vector<8x32xf32>
    %10 = tpu.matmul %7, %8, %cst_7 {dimension_numbers = #tpu.dot_dimension_numbers<[1], [0], [0], [1], [0, 0, 1, 1], [], []>} : vector<8x32xf32>, vector<32x32xf32>, vector<8x32xf32> -> vector<8x32xf32>
    %11 = vector.broadcast %9 : vector<1x32xf32> to vector<8x32xf32>
    %12 = arith.addf %10, %11 : vector<8x32xf32>
    %cst_8 = arith.constant 0.000000e+00 : f32
    %13 = vector.broadcast %cst_8 : f32 to vector<8x32xf32>
    %14 = arith.maximumf %12, %13 : vector<8x32xf32>
    %c66 = arith.constant 66 : index
    %c0_9 = arith.constant 0 : index
    %15 = vector.load %arg2[%c66, %c0_9] : memref<99x128xf32, #tpu.memory_space<vmem>>, vector<32x2xf32>
    %c98 = arith.constant 98 : index
    %c0_10 = arith.constant 0 : index
    %16 = vector.load %arg2[%c98, %c0_10] : memref<99x128xf32, #tpu.memory_space<vmem>>, vector<1x2xf32>
    %cst_11 = arith.constant dense<0.000000e+00> : vector<8x2xf32>
    %17 = tpu.matmul %14, %15, %cst_11 {dimension_numbers = #tpu.dot_dimension_numbers<[1], [0], [0], [1], [0, 0, 1, 1], [], []>} : vector<8x32xf32>, vector<32x2xf32>, vector<8x2xf32> -> vector<8x2xf32>
    %18 = vector.broadcast %16 : vector<1x2xf32> to vector<8x2xf32>
    %19 = arith.addf %17, %18 : vector<8x2xf32>
    %c0_12 = arith.constant 0 : index
    %c0_13 = arith.constant 0 : index
    %20 = vector.load %arg3[%c0_12, %c0_13] : memref<8x8xf32, #tpu.memory_space<vmem>>, vector<8x2xf32>
    tpu.vector_store %arg3[%c0_12, %c0_13], %19 {strides = array<i32>} : memref<8x8xf32, #tpu.memory_space<vmem>>, vector<8x2xf32>,
    %c0_14 = arith.constant 0 : index
    %c2 = arith.constant 2 : index
    %21 = vector.load %arg3[%c0_14, %c2] : memref<8x8xf32, #tpu.memory_space<vmem>>, vector<8x2xf32>
    tpu.vector_store %arg3[%c0_14, %c2], %19 {strides = array<i32>} : memref<8x8xf32, #tpu.memory_space<vmem>>, vector<8x2xf32>,
    %c0_15 = arith.constant 0 : index
    %c4 = arith.constant 4 : index
    %22 = vector.load %arg3[%c0_15, %c4] : memref<8x8xf32, #tpu.memory_space<vmem>>, vector<8x2xf32>
    tpu.vector_store %arg3[%c0_15, %c4], %19 {strides = array<i32>} : memref<8x8xf32, #tpu.memory_space<vmem>>, vector<8x2xf32>,
    %c0_16 = arith.constant 0 : index
    %c6 = arith.constant 6 : index
    %23 = vector.load %arg3[%c0_16, %c6] : memref<8x8xf32, #tpu.memory_space<vmem>>, vector<8x2xf32>
    tpu.vector_store %arg3[%c0_16, %c6], %19 {strides = array<i32>} : memref<8x8xf32, #tpu.memory_space<vmem>>, vector<8x2xf32>,
    return
  }
  func.func @transform_0(%arg0: i32) -> (i32, i32) {
    %c0_i32 = arith.constant 0 : i32
    %c0_i32_0 = arith.constant 0 : i32
    return %arg0, %c0_i32 : i32, i32
  }
  func.func @transform_1(%arg0: i32) -> (i32, i32) {
    %c0_i32 = arith.constant 0 : i32
    %c0_i32_0 = arith.constant 0 : i32
    %c0_i32_1 = arith.constant 0 : i32
    return %c0_i32, %c0_i32_0 : i32, i32
  }
  func.func @transform_2(%arg0: i32) -> (i32, i32) {
    %c0_i32 = arith.constant 0 : i32
    %c0_i32_0 = arith.constant 0 : i32
    return %arg0, %c0_i32 : i32, i32
  }
}

</mosaic_0001>

<llo_original>
// kernel: tpu_custom_call.1
$region0: #{tpu_custom_call.1}
  #allocation0 [shape = 'u32[]', space=smem, size = 0x4, offset = 0x4, fixed_abs, tag = 'smem constant byte address 0x4 - core index']
  #allocation1 [shape = 'u32[72,128]{1,0:T(1,128)}', space=vmem, size = 0x9000, scoped, tag = 'internal scratch']
  %s0 = inlined_call_operand.hbm [shape: f32[8,32], index: 0, kind: input, shape index: {}]
  %s1 = inlined_call_operand.hbm [shape: f32[99,128], index: 1, kind: input, shape index: {}]
  %s2 = inlined_call_operand.hbm [shape: f32[8,8], index: 2, kind: output, shape index: {}]
  %s3 = sld [smem:[#allocation0]]
  $region26: #{tpu_custom_call.1} parent=0
    _
  %s5 = ssub.s32 1, %s3
  %s6 = scalar_select 0, %s5, %s3
  $region1: #{tpu_custom_call.1} parent=0
    #allocation2 [shape = 'u8[4096]{0}', space=vmem, size = 0x1000, scoped, tag = 'input window, operand 0, single buffered']
    #allocation3 [shape = 's32[1]{0}', space=sflag, size = 0x4, scoped, tag = 'scoped memory for tpu_custom_call.1']
    #allocation4 [shape = 's32[1]{0}', space=sflag, size = 0x4, scoped, tag = 'scoped memory for tpu_custom_call.1']
    #allocation5 [shape = 'u8[53248]{0}', space=vmem, size = 0xd000, scoped, tag = 'input window, operand 1, single buffered']
    #allocation6 [shape = 's32[1]{0}', space=sflag, size = 0x4, scoped, tag = 'scoped memory for tpu_custom_call.1']
    #allocation7 [shape = 'u8[4096]{0}', space=vmem, size = 0x1000, scoped, tag = 'output window, operand 0, single buffered']
    %7 = vsyncpa [#allocation3], 0
    %8 = vsyncpa [#allocation6], 0
    %9 = vsyncpa [#allocation4], 0
    // Predicated region
    $region2: #{tpu_custom_call.1} parent=1 // pred_check
      _
    $region3: #{tpu_custom_call.1} parent=1 // pred_check_branch
      %11 = sbr.rel (0) target = $region5
    $region4: #{tpu_custom_call.1} parent=1 // pred_region
      %13 = vsyncadd [#allocation3], 0
      %s15 = sshll.u32 %s0, 4
      %s16 = int_to_ptr.hbm [resolvable:$true] %s15
      %s17 = sshll.u32 [#allocation2], 4
      %s18 = int_to_ptr.vmem [resolvable:$true] %s17
      %20 = dma.hbm_to_vmem [thread:$0]  %s16, 128, %s18, [#allocation3]
    $region5: #{tpu_custom_call.1} parent=1 // pred_fallthru
      _
    // Predicated region
    $region6: #{tpu_custom_call.1} parent=1 // pred_check
      _
    $region7: #{tpu_custom_call.1} parent=1 // pred_check_branch
      %22 = sbr.rel (0) target = $region9
    $region8: #{tpu_custom_call.1} parent=1 // pred_region
      %24 = vsyncadd [#allocation6], 0
      %s25 = sshll.u32 %s1, 4
      %s26 = int_to_ptr.hbm [resolvable:$true] %s25
      %s27 = sshll.u32 [#allocation5], 4
      %s28 = int_to_ptr.vmem [resolvable:$true] %s27
      %33 = dma.hbm_to_vmem [thread:$0]  %s26, 1664, %s28, [#allocation6], 128, 128, 8
    $region9: #{tpu_custom_call.1} parent=1 // pred_fallthru
      _
    // Predicated region
    $region10: #{tpu_custom_call.1} parent=1 // pred_check
      _
    $region11: #{tpu_custom_call.1} parent=1 // pred_check_branch
      %35 = sbr.rel (0) target = $region13
    $region12: #{tpu_custom_call.1} parent=1 // pred_region
      %37 = dma.done [#allocation3], 128
    $region13: #{tpu_custom_call.1} parent=1 // pred_fallthru
      _
    // Predicated region
    $region14: #{tpu_custom_call.1} parent=1 // pred_check
      _
    $region15: #{tpu_custom_call.1} parent=1 // pred_check_branch
      %39 = sbr.rel (0) target = $region17
    $region16: #{tpu_custom_call.1} parent=1 // pred_region
      %41 = dma.done [#allocation6], 1664
    $region17: #{tpu_custom_call.1} parent=1 // pred_fallthru
      _
    %v42 = vld [vmem:[#allocation2] sm:$0xff]
    %v43 = vld [vmem:[#allocation5] sm:$0xff]
    %v44 = vld [vmem:[#allocation5 + $0x8] sm:$0xff]
    %v45 = vld [vmem:[#allocation5 + $0x10] sm:$0xff]
    %v46 = vld [vmem:[#allocation5 + $0x18] sm:$0xff]
    %v47 = vld [vmem:[#allocation5 + $0x20] sm:$0x1]
    %v48 = vperm.slane %v47, 0
    %vm49 = vcmask 261120
    %v51 = vsel %vm49, %v42, 0
    %53 = vmatpush.msra.mxu0 0.0
    %54 = vmatpush.msra.mxu0 0.0
    %55 = vmatpush.msra.mxu0 0.0
    %56 = vmatpush.msra.mxu0 0.0
    %57 = vmatpush.msra.mxu0 0.0
    %58 = vmatpush.msra.mxu0 0.0
    %59 = vmatpush.msra.mxu0 0.0
    %60 = vmatpush.msra.mxu0 0.0
    %61 = vmatpush.msra.mxu0 0.0
    %62 = vmatpush.msra.mxu0 0.0
    %63 = vmatpush.msra.mxu0 0.0
    %64 = vmatpush.msra.mxu0 0.0
    %65 = vmatpush.msra.mxu0 %v46
    %66 = vmatpush.msra.mxu0 %v45
    %67 = vmatpush.msra.mxu0 %v44
    %68 = vmatpush.msra.mxu0 %v43
    %69 = vmatmul.f32.gmra.mxu0 %v51
    %v70 = vpop.f32.mrf.mxu0
    %v71 = vadd.f32 %v48, %v70
    %72 = vdwg.mxu0
    %v73 = vmax.f32 %v71, 0.0
    %v74 = vld [vmem:[#allocation5 + $0x21] sm:$0xff]
    %v75 = vld [vmem:[#allocation5 + $0x29] sm:$0xff]
    %v76 = vld [vmem:[#allocation5 + $0x31] sm:$0xff]
    %v77 = vld [vmem:[#allocation5 + $0x39] sm:$0xff]
    %v78 = vld [vmem:[#allocation5 + $0x41] sm:$0x1]
    %v79 = vperm.slane %v78, 0
    %v81 = vsel %vm49, %v73, 0
    %83 = vmatpush.msra.mxu0 0.0
    %84 = vmatpush.msra.mxu0 0.0
    %85 = vmatpush.msra.mxu0 0.0
    %86 = vmatpush.msra.mxu0 0.0
    %87 = vmatpush.msra.mxu0 0.0
    %88 = vmatpush.msra.mxu0 0.0
    %89 = vmatpush.msra.mxu0 0.0
    %90 = vmatpush.msra.mxu0 0.0
    %91 = vmatpush.msra.mxu0 0.0
    %92 = vmatpush.msra.mxu0 0.0
    %93 = vmatpush.msra.mxu0 0.0
    %94 = vmatpush.msra.mxu0 0.0
    %95 = vmatpush.msra.mxu0 %v77
    %96 = vmatpush.msra.mxu0 %v76
    %97 = vmatpush.msra.mxu0 %v75
    %98 = vmatpush.msra.mxu0 %v74
    %99 = vmatmul.f32.gmra.mxu0 %v81
    %v100 = vpop.f32.mrf.mxu0
    %v101 = vadd.f32 %v79, %v100
    %102 = vdwg.mxu0
    %v103 = vmax.f32 %v101, 0.0
    %v104 = vld [vmem:[#allocation5 + $0x42] sm:$0xff]
    %v105 = vld [vmem:[#allocation5 + $0x4a] sm:$0xff]
    %v106 = vld [vmem:[#allocation5 + $0x52] sm:$0xff]
    %v107 = vld [vmem:[#allocation5 + $0x5a] sm:$0xff]
    %v108 = vld [vmem:[#allocation5 + $0x62] sm:$0x1]
    %v109 = vperm.slane %v108, 0
    %v111 = vsel %vm49, %v103, 0
    %113 = vmatpush.msra.mxu0 0.0
    %114 = vmatpush.msra.mxu0 0.0
    %115 = vmatpush.msra.mxu0 0.0
    %116 = vmatpush.msra.mxu0 0.0
    %117 = vmatpush.msra.mxu0 0.0
    %118 = vmatpush.msra.mxu0 0.0
    %119 = vmatpush.msra.mxu0 0.0
    %120 = vmatpush.msra.mxu0 0.0
    %121 = vmatpush.msra.mxu0 0.0
    %122 = vmatpush.msra.mxu0 0.0
    %123 = vmatpush.msra.mxu0 0.0
    %124 = vmatpush.msra.mxu0 0.0
    %125 = vmatpush.msra.mxu0 %v107
    %126 = vmatpush.msra.mxu0 %v106
    %127 = vmatpush.msra.mxu0 %v105
    %128 = vmatpush.msra.mxu0 %v104
    %129 = vmatmul.f32.gmra.mxu0 %v111
    %v130 = vpop.f32.mrf.mxu0
    %v131 = vadd.f32 %v109, %v130
    %132 = vdwg.mxu0
    %vm133 = vcmask 15360
    %134 = vst.msk [vmem:[#allocation7] sm:$0xff] %vm133, %v131
    %136 = vrot.lane.b32.xlu0 %v131, 2
    %v137 = vpop.permute.xlu0 %136
    %vm139 = vcmask 31760
    %140 = vst.msk [vmem:[#allocation7] sm:$0xff] %vm139, %v137
    %141 = vrot.lane.b32.xlu0 %v131, 4
    %v142 = vpop.permute.xlu0 %141
    %vm144 = vcmask 48160
    %145 = vst.msk [vmem:[#allocation7] sm:$0xff] %vm144, %v142
    %146 = vrot.lane.b32.xlu0 %v131, 6
    %v147 = vpop.permute.xlu0 %146
    %vm149 = vcmask 64560
    %150 = vst.msk [vmem:[#allocation7] sm:$0xff] %vm149, %v147
    // Predicated region
    $region18: #{tpu_custom_call.1} parent=1 // pred_check
      _
    $region19: #{tpu_custom_call.1} parent=1 // pred_check_branch
      %152 = sbr.rel (0) target = $region21
    $region20: #{tpu_custom_call.1} parent=1 // pred_region
      %154 = vsyncadd [#allocation4], 0
      %s156 = sshll.u32 [#allocation7], 4
      %s157 = int_to_ptr.vmem [resolvable:$true] %s156
      %s158 = sshll.u32 %s2, 4
      %s159 = int_to_ptr.hbm [resolvable:$true] %s158
      %161 = dma.vmem_to_hbm [thread:$0]  %s157, 128, %s159, [#allocation4]
    $region21: #{tpu_custom_call.1} parent=1 // pred_fallthru
      _
    // Predicated region
    $region22: #{tpu_custom_call.1} parent=1 // pred_check
      _
    $region23: #{tpu_custom_call.1} parent=1 // pred_check_branch
      %163 = sbr.rel (0) target = $region25
    $region24: #{tpu_custom_call.1} parent=1 // pred_region
      %165 = dma.done [#allocation4], 128
    $region25: #{tpu_custom_call.1} parent=1 // pred_fallthru
      _
    %166 = vsyncpa [#allocation3], 1
    %167 = vsyncpa [#allocation6], 1
    %168 = vsyncpa [#allocation4], 1

</llo_original>
